<compile_context>
chip_gen: v6e
topology: v6e:2x2x1
jax: 0.10.0
libtpu: 0.0.40
codegen_flags: <defaults>
</compile_context>

<pallas_src>
import functools

import jax
import jax.numpy as jnp
import numpy as np
from jax.experimental import pallas as pl
from jax.experimental.pallas import tpu as pltpu

H1 = 256          # shallow_layer1 out channels
H2 = 128          # shallow_layer2 out channels


def _round_up(x: int, m: int) -> int:
    return ((x + m - 1) // m) * m


def _shallow_big_kernel(x_ref, w1_ref, b1_ref, w2_ref, b2_ref, w3_ref, b3_ref,
                        o_ref):
    # x_ref : (1, C_in, TN) f32   (pixels on the lane axis)
    # w*_ref: (out_c, in_c) bf16  (full PyTorch-style conv weights, squeezed)
    # b*_ref: (out_c, 1)    f32   (lane-broadcast column vectors)
    # o_ref : (1, K, TN)    f32   (lane-dense: TN is a multiple of 128)
    xt = x_ref[0].astype(jnp.bfloat16)                       # (C_in, TN)

    # Layer 1: (H1, C_in) @ (C_in, TN). K=8 is thin for the MXU but tiny in
    # absolute cost; kept on the MXU for simplicity (VPU outer-product variant
    # is a possible v6e micro-opt).
    h1 = jnp.dot(w1_ref[...], xt, preferred_element_type=jnp.float32)
    h1 = jnp.maximum(h1 + b1_ref[...], 0.0)                  # (H1, TN) f32

    # Layer 2: (H2, H1) @ (H1, TN)  — dominant FLOPs, bf16 MXU path.
    h2 = jnp.dot(w2_ref[...], h1.astype(jnp.bfloat16),
                 preferred_element_type=jnp.float32)
    h2 = jnp.maximum(h2 + b2_ref[...], 0.0)                  # (H2, TN) f32

    # Layer 3: (K, H2) @ (H2, TN)
    out = jnp.dot(w3_ref[...], h2.astype(jnp.bfloat16),
                  preferred_element_type=jnp.float32)
    o_ref[0] = (out + b3_ref[...]).astype(o_ref.dtype)       # (K, TN)


@functools.partial(jax.jit, static_argnames=("tn_max",))
def shallow_big_forward(x, w1, b1, w2, b2, w3, b3, *, tn_max=2048):
    """x: (b, q, f, h, w) float32.

    Weights follow the (squeezed) PyTorch Conv2d layout:
      w1: (256, q*f), w2: (128, 256), w3: (num_classes, 128), b*: (out_c,)
    Returns (b, num_classes, h, w) float32 (NCHW, like the PyTorch module).
    """
    b, q, f, h, w = x.shape
    c_in = q * f
    num_classes = w3.shape[0]
    hw = h * w

    # Native NCHW layout: (b, q, f, h, w) -> (b, C, h*w)  (pure reshape).
    x_cn = x.reshape(b, c_in, hw)

    # Pixel tile: biggest multiple of 128 up to tn_max; pad pixel axis if
    # needed so hw_pad % tn == 0 (no-op for the shapes used here).
    hw_128 = _round_up(hw, 128)
    tn = hw_128 if hw_128 <= tn_max else tn_max
    hw_pad = _round_up(hw, tn)
    if hw_pad != hw:
        x_cn = jnp.pad(x_cn, ((0, 0), (0, 0), (0, hw_pad - hw)))

    # bf16 weights (tiny, cast once); biases stay f32 as (out_c, 1) columns.
    w1b = w1.astype(jnp.bfloat16)
    w2b = w2.astype(jnp.bfloat16)
    w3b = w3.astype(jnp.bfloat16)
    b1c = b1.reshape(H1, 1).astype(jnp.float32)
    b2c = b2.reshape(H2, 1).astype(jnp.float32)
    b3c = b3.reshape(num_classes, 1).astype(jnp.float32)

    grid = (b, hw_pad // tn)
    full = lambda ib, ip: (0, 0)

    out = pl.pallas_call(
        _shallow_big_kernel,
        out_shape=jax.ShapeDtypeStruct((b, num_classes, hw_pad), jnp.float32),
        grid_spec=pltpu.PrefetchScalarGridSpec(
            num_scalar_prefetch=0,
            grid=grid,
            in_specs=[
                pl.BlockSpec((1, c_in, tn), lambda ib, ip: (ib, 0, ip)),  # x
                pl.BlockSpec((H1, c_in), full),                           # W1
                pl.BlockSpec((H1, 1), full),                              # b1
                pl.BlockSpec((H2, H1), full),                             # W2
                pl.BlockSpec((H2, 1), full),                              # b2
                pl.BlockSpec((num_classes, H2), full),                    # W3
                pl.BlockSpec((num_classes, 1), full),                     # b3
            ],
            out_specs=pl.BlockSpec((1, num_classes, tn),
                                   lambda ib, ip: (ib, 0, ip)),
        ),
        compiler_params=pltpu.CompilerParams(
            dimension_semantics=("parallel", "parallel"),
            vmem_limit_bytes=32 * 1024 * 1024,
        ),
    )(x_cn, w1b, b1c, w2b, b2c, w3b, b3c)

    if hw_pad != hw:
        out = out[:, :, :hw]
    # Already NCHW: (b, K, h*w) -> (b, K, h, w)  (pure reshape).
    return out.reshape(b, num_classes, h, w)


def _init_params(key, input_dim, num_classes):
    """Deterministic synthetic params in PyTorch Conv2d (out_c, in_c) layout."""
    k1, k2, k3, k4, k5, k6 = jax.random.split(key, 6)
    w1 = jax.random.normal(k1, (H1, input_dim), jnp.float32) * 0.05
    b1 = jax.random.normal(k2, (H1,), jnp.float32) * 0.05
    w2 = jax.random.normal(k3, (H2, H1), jnp.float32) * 0.05
    b2 = jax.random.normal(k4, (H2,), jnp.float32) * 0.05
    w3 = jax.random.normal(k5, (num_classes, H2), jnp.float32) * 0.05
    b3 = jax.random.normal(k6, (num_classes,), jnp.float32) * 0.05
    return w1, b1, w2, b2, w3, b3


def _reference_forward(x, w1, b1, w2, b2, w3, b3):
    """Pure-JAX reference with the same bf16-operand / f32-accumulate math."""
    b, q, f, h, w = x.shape
    xf = x.reshape(b, q * f, h * w).astype(jnp.bfloat16)          # (b, C, N)
    w1b, w2b, w3b = (wt.astype(jnp.bfloat16) for wt in (w1, w2, w3))
    h1 = jnp.maximum(
        jnp.einsum("oc,bcn->bon", w1b, xf,
                   preferred_element_type=jnp.float32) + b1[None, :, None], 0.0)
    h2 = jnp.maximum(
        jnp.einsum("oc,bcn->bon", w2b, h1.astype(jnp.bfloat16),
                   preferred_element_type=jnp.float32) + b2[None, :, None], 0.0)
    out = (jnp.einsum("oc,bcn->bon", w3b, h2.astype(jnp.bfloat16),
                      preferred_element_type=jnp.float32) + b3[None, :, None])
    return out.reshape(b, -1, h, w)


if __name__ == "__main__":
    key = jax.random.PRNGKey(0)
    kx, kp = jax.random.split(key)

    # Small shapes: b=2, q=2, f=4 (-> input_dim = 8), h=w=16, num_classes=20.
    b, q, f, h, w = 2, 2, 4, 16, 16
    input_dim = q * f
    num_classes = 20

    x = jax.random.normal(kx, (b, q, f, h, w), jnp.float32)
    params = _init_params(kp, input_dim, num_classes)

    out = shallow_big_forward(x, *params)
    out = jax.block_until_ready(out)

    ref = _reference_forward(x, *params)
    assert out.shape == (b, num_classes, h, w), out.shape
    np.testing.assert_allclose(np.asarray(out), np.asarray(ref),
                               rtol=1e-2, atol=1e-4)
    print("KERNEL_OK")
</pallas_src>

<mosaic_0001>
module attributes {stable_mosaic.version = 11 : i64} {
  func.func @_shallow_big_kernel(%arg0: i32, %arg1: i32, %arg2: memref<1x8x256xf32, #tpu.memory_space<vmem>>, %arg3: memref<256x8xbf16, #tpu.memory_space<vmem>>, %arg4: memref<256x1xf32, #tpu.memory_space<vmem>>, %arg5: memref<128x256xbf16, #tpu.memory_space<vmem>>, %arg6: memref<128x1xf32, #tpu.memory_space<vmem>>, %arg7: memref<20x128xbf16, #tpu.memory_space<vmem>>, %arg8: memref<20x1xf32, #tpu.memory_space<vmem>>, %arg9: memref<1x20x256xf32, #tpu.memory_space<vmem>>) attributes {dimension_semantics = [#tpu.dimension_semantics<parallel>, #tpu.dimension_semantics<parallel>], iteration_bounds = array<i64: 2, 1>, scalar_prefetch = 0 : i64, scratch_operands = 0 : i64, tpu.core_type = #tpu.core_type<tc>, window_params = [{transform_indices = @transform_0, window_bounds = array<i64: 1, 8, 256>}, {pipeline_mode = #tpu.pipeline_mode<synchronous>, transform_indices = @transform_1, window_bounds = array<i64: 256, 8>}, {pipeline_mode = #tpu.pipeline_mode<synchronous>, transform_indices = @transform_2, window_bounds = array<i64: 256, 1>}, {pipeline_mode = #tpu.pipeline_mode<synchronous>, transform_indices = @transform_3, window_bounds = array<i64: 128, 256>}, {pipeline_mode = #tpu.pipeline_mode<synchronous>, transform_indices = @transform_4, window_bounds = array<i64: 128, 1>}, {pipeline_mode = #tpu.pipeline_mode<synchronous>, transform_indices = @transform_5, window_bounds = array<i64: 20, 128>}, {pipeline_mode = #tpu.pipeline_mode<synchronous>, transform_indices = @transform_6, window_bounds = array<i64: 20, 1>}, {transform_indices = @transform_7, window_bounds = array<i64: 1, 20, 256>}]} {
    %c0 = arith.constant 0 : index
    %c0_0 = arith.constant 0 : index
    %c0_1 = arith.constant 0 : index
    %0 = vector.load %arg2[%c0, %c0_0, %c0_1] : memref<1x8x256xf32, #tpu.memory_space<vmem>>, vector<1x8x256xf32>
    %1 = vector.shape_cast %0 : vector<1x8x256xf32> to vector<8x256xf32>
    %2 = arith.truncf %1 : vector<8x256xf32> to vector<8x256xbf16>
    %c0_2 = arith.constant 0 : index
    %c0_3 = arith.constant 0 : index
    %3 = vector.load %arg3[%c0_2, %c0_3] : memref<256x8xbf16, #tpu.memory_space<vmem>>, vector<256x8xbf16>
    %cst = arith.constant dense<0.000000e+00> : vector<256x256xf32>
    %4 = tpu.matmul %3, %2, %cst {dimension_numbers = #tpu.dot_dimension_numbers<[1], [0], [0], [1], [0, 0, 1, 1], [], []>} : vector<256x8xbf16>, vector<8x256xbf16>, vector<256x256xf32> -> vector<256x256xf32>
    %c0_4 = arith.constant 0 : index
    %c0_5 = arith.constant 0 : index
    %5 = vector.load %arg4[%c0_4, %c0_5] : memref<256x1xf32, #tpu.memory_space<vmem>>, vector<256x1xf32>
    %6 = vector.broadcast %5 : vector<256x1xf32> to vector<256x256xf32>
    %7 = arith.addf %4, %6 : vector<256x256xf32>
    %cst_6 = arith.constant 0.000000e+00 : f32
    %8 = vector.broadcast %cst_6 : f32 to vector<256x256xf32>
    %9 = arith.maximumf %7, %8 : vector<256x256xf32>
    %c0_7 = arith.constant 0 : index
    %c0_8 = arith.constant 0 : index
    %10 = vector.load %arg5[%c0_7, %c0_8] : memref<128x256xbf16, #tpu.memory_space<vmem>>, vector<128x256xbf16>
    %11 = arith.truncf %9 : vector<256x256xf32> to vector<256x256xbf16>
    %cst_9 = arith.constant dense<0.000000e+00> : vector<128x256xf32>
    %12 = tpu.matmul %10, %11, %cst_9 {dimension_numbers = #tpu.dot_dimension_numbers<[1], [0], [0], [1], [0, 0, 1, 1], [], []>} : vector<128x256xbf16>, vector<256x256xbf16>, vector<128x256xf32> -> vector<128x256xf32>
    %c0_10 = arith.constant 0 : index
    %c0_11 = arith.constant 0 : index
    %13 = vector.load %arg6[%c0_10, %c0_11] : memref<128x1xf32, #tpu.memory_space<vmem>>, vector<128x1xf32>
    %14 = vector.broadcast %13 : vector<128x1xf32> to vector<128x256xf32>
    %15 = arith.addf %12, %14 : vector<128x256xf32>
    %cst_12 = arith.constant 0.000000e+00 : f32
    %16 = vector.broadcast %cst_12 : f32 to vector<128x256xf32>
    %17 = arith.maximumf %15, %16 : vector<128x256xf32>
    %c0_13 = arith.constant 0 : index
    %c0_14 = arith.constant 0 : index
    %18 = vector.load %arg7[%c0_13, %c0_14] : memref<20x128xbf16, #tpu.memory_space<vmem>>, vector<20x128xbf16>
    %19 = arith.truncf %17 : vector<128x256xf32> to vector<128x256xbf16>
    %cst_15 = arith.constant dense<0.000000e+00> : vector<20x256xf32>
    %20 = tpu.matmul %18, %19, %cst_15 {dimension_numbers = #tpu.dot_dimension_numbers<[1], [0], [0], [1], [0, 0, 1, 1], [], []>} : vector<20x128xbf16>, vector<128x256xbf16>, vector<20x256xf32> -> vector<20x256xf32>
    %c0_16 = arith.constant 0 : index
    %c0_17 = arith.constant 0 : index
    %21 = vector.load %arg8[%c0_16, %c0_17] : memref<20x1xf32, #tpu.memory_space<vmem>>, vector<20x1xf32>
    %22 = vector.broadcast %21 : vector<20x1xf32> to vector<20x256xf32>
    %23 = arith.addf %20, %22 : vector<20x256xf32>
    %c0_18 = arith.constant 0 : index
    %c0_19 = arith.constant 0 : index
    %c0_20 = arith.constant 0 : index
    %24 = vector.load %arg9[%c0_18, %c0_19, %c0_20] : memref<1x20x256xf32, #tpu.memory_space<vmem>>, vector<1x20x256xf32>
    %25 = vector.shape_cast %24 : vector<1x20x256xf32> to vector<20x256xf32>
    %26 = vector.shape_cast %23 : vector<20x256xf32> to vector<1x20x256xf32>
    tpu.vector_store %arg9[%c0_18, %c0_19, %c0_20], %26 {strides = array<i32>} : memref<1x20x256xf32, #tpu.memory_space<vmem>>, vector<1x20x256xf32>,
    return
  }
  func.func @transform_0(%arg0: i32, %arg1: i32) -> (i32, i32, i32) {
    %c0_i32 = arith.constant 0 : i32
    %c0_i32_0 = arith.constant 0 : i32
    return %arg0, %c0_i32, %arg1 : i32, i32, i32
  }
  func.func @transform_1(%arg0: i32, %arg1: i32) -> (i32, i32) {
    %c0_i32 = arith.constant 0 : i32
    %c0_i32_0 = arith.constant 0 : i32
    %c0_i32_1 = arith.constant 0 : i32
    return %c0_i32, %c0_i32_0 : i32, i32
  }
  func.func @transform_2(%arg0: i32, %arg1: i32) -> (i32, i32) {
    %c0_i32 = arith.constant 0 : i32
    %c0_i32_0 = arith.constant 0 : i32
    %c0_i32_1 = arith.constant 0 : i32
    return %c0_i32, %c0_i32_0 : i32, i32
  }
  func.func @transform_3(%arg0: i32, %arg1: i32) -> (i32, i32) {
    %c0_i32 = arith.constant 0 : i32
    %c0_i32_0 = arith.constant 0 : i32
    %c0_i32_1 = arith.constant 0 : i32
    return %c0_i32, %c0_i32_0 : i32, i32
  }
  func.func @transform_4(%arg0: i32, %arg1: i32) -> (i32, i32) {
    %c0_i32 = arith.constant 0 : i32
    %c0_i32_0 = arith.constant 0 : i32
    %c0_i32_1 = arith.constant 0 : i32
    return %c0_i32, %c0_i32_0 : i32, i32
  }
  func.func @transform_5(%arg0: i32, %arg1: i32) -> (i32, i32) {
    %c0_i32 = arith.constant 0 : i32
    %c0_i32_0 = arith.constant 0 : i32
    %c0_i32_1 = arith.constant 0 : i32
    return %c0_i32, %c0_i32_0 : i32, i32
  }
  func.func @transform_6(%arg0: i32, %arg1: i32) -> (i32, i32) {
    %c0_i32 = arith.constant 0 : i32
    %c0_i32_0 = arith.constant 0 : i32
    %c0_i32_1 = arith.constant 0 : i32
    return %c0_i32, %c0_i32_0 : i32, i32
  }
  func.func @transform_7(%arg0: i32, %arg1: i32) -> (i32, i32, i32) {
    %c0_i32 = arith.constant 0 : i32
    %c0_i32_0 = arith.constant 0 : i32
    return %arg0, %c0_i32, %arg1 : i32, i32, i32
  }
}

</mosaic_0001>

<llo_original>
// kernel: shallow_big_forward.1
$region0: #{shallow_big_forward.1}
  #allocation0 [shape = 'u32[]', space=smem, size = 0x4, offset = 0x4, fixed_abs, tag = 'smem constant byte address 0x4 - core index']
  #allocation1 [shape = 'u32[144,128]{1,0:T(1,128)}', space=vmem, size = 0x12000, scoped, tag = 'internal scratch']
  %s0 = inlined_call_operand.vmem [shape: f32[2,8,256], index: 0, kind: input, shape index: {}]
  %s1 = inlined_call_operand.vmem [shape: bf16[256,8], index: 1, kind: input, shape index: {}]
  %s2 = inlined_call_operand.vmem [shape: f32[256,1], index: 2, kind: input, shape index: {}]
  %s3 = inlined_call_operand.vmem [shape: bf16[128,256], index: 3, kind: input, shape index: {}]
  %s4 = inlined_call_operand.vmem [shape: f32[128,1], index: 4, kind: input, shape index: {}]
  %s5 = inlined_call_operand.vmem [shape: bf16[20,128], index: 5, kind: input, shape index: {}]
  %s6 = inlined_call_operand.vmem [shape: f32[20,1], index: 6, kind: input, shape index: {}]
  %s7 = inlined_call_operand.vmem [shape: f32[2,20,256], index: 7, kind: output, shape index: {}]
  %s8 = sld [smem:[#allocation0]]
  $region61: #{shallow_big_forward.1} parent=0
    _
  %s10 = ssub.s32 1, %s8
  %s11 = scalar_select 0, %s10, %s8
  loop: start=0, step=1, limit=4
  $region2: #{shallow_big_forward.1} parent=0 // loop_pre_header
    _
  $region3: #{shallow_big_forward.1} parent=0 // loop_header
    %s13 = sphi 0, %s17
    %p14 = scmp.ge.s32.totalorder %s13, 4
    %s20 = sphi 0, %s32
    %s21 = sphi 0, %s28
    %s22 = sphi 0, %s20
    %s23 = sphi 0, %s21
    %s24 = sphi 0, %s22
    %s25 = sphi 0, %s23
    %s37 = sphi 0, %s39
    %s40 = sphi 0, %s37
    %s41 = sphi 0, %s40
    %s57 = sphi 0, %s41
    %s61 = sphi 0, %s61
    %s63 = sphi 0, %s61
    %s64 = sphi 0, %s63
    %s78 = sphi 0, %s64
    %s82 = sphi 0, %s82
    %s84 = sphi 0, %s82
    %s85 = sphi 0, %s84
    %s99 = sphi 0, %s85
    %s103 = sphi 0, %s103
    %s105 = sphi 0, %s103
    %s106 = sphi 0, %s105
    %s120 = sphi 0, %s106
    %s124 = sphi 0, %s124
    %s126 = sphi 0, %s124
    %s127 = sphi 0, %s126
    %s141 = sphi 0, %s127
    %s145 = sphi 0, %s145
    %s147 = sphi 0, %s145
    %s148 = sphi 0, %s147
    %s162 = sphi 0, %s148
    %s166 = sphi 0, %s166
    %s168 = sphi 0, %s166
    %s169 = sphi 0, %s168
    %s183 = sphi 0, %s169
    %s191 = sphi 0, %s193
    %s194 = sphi 0, %s191
    %s195 = sphi 0, %s194
    %s211 = sphi 0, %s195
  $region4: #{shallow_big_forward.1} parent=0 // loop_header_branch
    %16 = sbr.rel (%p14) target = $region8
  $region5: #{shallow_big_forward.1} parent=0 // loop_body
    %s18 = ssub.s32 %s13, 1
    %s19 = ssub.s32 %s13, 2
    %s26 = sadd.s32 1, %s21
    %p27 = scmp.ge.s32.totalorder %s26, 1
    %s28 = scalar_select %p27, 0, %s26
    %s29 = sadd.s32 1, %s20
    %s30 = scalar_select %p27, %s29, %s20
    %p31 = scmp.ge.s32.totalorder %s30, 2
    %s32 = scalar_select %p31, 0, %s30
    %s33 = ssub.s32 %s20, %s32
    %s34 = ssub.s32 %s21, %s28
    %s35 = sor.u32 %s33, %s34
    %p36 = scmp.eq.s32.totalorder %s35, 0
    %s38 = sadd.s32 %s37, 1
    %s39 = scalar_select %p36, %s37, %s38
    %p42 = pneg %p36
    %p43 = scmp.eq.s32.totalorder %s13, 1
    %p44 = por %p42, %p43
    %p45 = scmp.ne.s32.totalorder %s37, %s40
    %p46 = scmp.eq.s32.totalorder %s13, 0
    %p47 = por %p45, %p46
    %p48 = scmp.ne.s32.totalorder %s37, %s40
    %p49 = scmp.eq.s32.totalorder %s18, 1
    %p50 = por %p48, %p49
    %p51 = scmp.ne.s32.totalorder %s40, %s41
    %p52 = scmp.eq.s32.totalorder %s18, 0
    %p53 = por %p51, %p52
    %p54 = scmp.ne.s32.totalorder %s40, %s41
    %p55 = scmp.eq.s32.totalorder %s19, 1
    %p56 = por %p54, %p55
    %p58 = scmp.ne.s32.totalorder %s41, %s57
    %p59 = scmp.eq.s32.totalorder %s19, 0
    %p60 = por %p58, %p59
    %s62 = sadd.s32 %s61, 1
    %p65 = scmp.eq.s32.totalorder %s13, 1
    %p66 = scmp.ne.s32.totalorder %s61, %s63
    %p67 = scmp.eq.s32.totalorder %s13, 0
    %p68 = por %p66, %p67
    %p69 = scmp.ne.s32.totalorder %s61, %s63
    %p70 = scmp.eq.s32.totalorder %s18, 1
    %p71 = por %p69, %p70
    %p72 = scmp.ne.s32.totalorder %s63, %s64
    %p73 = scmp.eq.s32.totalorder %s18, 0
    %p74 = por %p72, %p73
    %p75 = scmp.ne.s32.totalorder %s63, %s64
    %p76 = scmp.eq.s32.totalorder %s19, 1
    %p77 = por %p75, %p76
    %p79 = scmp.ne.s32.totalorder %s64, %s78
    %p80 = scmp.eq.s32.totalorder %s19, 0
    %p81 = por %p79, %p80
    %s83 = sadd.s32 %s82, 1
    %p86 = scmp.eq.s32.totalorder %s13, 1
    %p87 = scmp.ne.s32.totalorder %s82, %s84
    %p88 = scmp.eq.s32.totalorder %s13, 0
    %p89 = por %p87, %p88
    %p90 = scmp.ne.s32.totalorder %s82, %s84
    %p91 = scmp.eq.s32.totalorder %s18, 1
    %p92 = por %p90, %p91
    %p93 = scmp.ne.s32.totalorder %s84, %s85
    %p94 = scmp.eq.s32.totalorder %s18, 0
    %p95 = por %p93, %p94
    %p96 = scmp.ne.s32.totalorder %s84, %s85
    %p97 = scmp.eq.s32.totalorder %s19, 1
    %p98 = por %p96, %p97
    %p100 = scmp.ne.s32.totalorder %s85, %s99
    %p101 = scmp.eq.s32.totalorder %s19, 0
    %p102 = por %p100, %p101
    %s104 = sadd.s32 %s103, 1
    %p107 = scmp.eq.s32.totalorder %s13, 1
    %p108 = scmp.ne.s32.totalorder %s103, %s105
    %p109 = scmp.eq.s32.totalorder %s13, 0
    %p110 = por %p108, %p109
    %p111 = scmp.ne.s32.totalorder %s103, %s105
    %p112 = scmp.eq.s32.totalorder %s18, 1
    %p113 = por %p111, %p112
    %p114 = scmp.ne.s32.totalorder %s105, %s106
    %p115 = scmp.eq.s32.totalorder %s18, 0
    %p116 = por %p114, %p115
    %p117 = scmp.ne.s32.totalorder %s105, %s106
    %p118 = scmp.eq.s32.totalorder %s19, 1
    %p119 = por %p117, %p118
    %p121 = scmp.ne.s32.totalorder %s106, %s120
    %p122 = scmp.eq.s32.totalorder %s19, 0
    %p123 = por %p121, %p122
    %s125 = sadd.s32 %s124, 1
    %p128 = scmp.eq.s32.totalorder %s13, 1
    %p129 = scmp.ne.s32.totalorder %s124, %s126
    %p130 = scmp.eq.s32.totalorder %s13, 0
    %p131 = por %p129, %p130
    %p132 = scmp.ne.s32.totalorder %s124, %s126
    %p133 = scmp.eq.s32.totalorder %s18, 1
    %p134 = por %p132, %p133
    %p135 = scmp.ne.s32.totalorder %s126, %s127
    %p136 = scmp.eq.s32.totalorder %s18, 0
    %p137 = por %p135, %p136
    %p138 = scmp.ne.s32.totalorder %s126, %s127
    %p139 = scmp.eq.s32.totalorder %s19, 1
    %p140 = por %p138, %p139
    %p142 = scmp.ne.s32.totalorder %s127, %s141
    %p143 = scmp.eq.s32.totalorder %s19, 0
    %p144 = por %p142, %p143
    %s146 = sadd.s32 %s145, 1
    %p149 = scmp.eq.s32.totalorder %s13, 1
    %p150 = scmp.ne.s32.totalorder %s145, %s147
    %p151 = scmp.eq.s32.totalorder %s13, 0
    %p152 = por %p150, %p151
    %p153 = scmp.ne.s32.totalorder %s145, %s147
    %p154 = scmp.eq.s32.totalorder %s18, 1
    %p155 = por %p153, %p154
    %p156 = scmp.ne.s32.totalorder %s147, %s148
    %p157 = scmp.eq.s32.totalorder %s18, 0
    %p158 = por %p156, %p157
    %p159 = scmp.ne.s32.totalorder %s147, %s148
    %p160 = scmp.eq.s32.totalorder %s19, 1
    %p161 = por %p159, %p160
    %p163 = scmp.ne.s32.totalorder %s148, %s162
    %p164 = scmp.eq.s32.totalorder %s19, 0
    %p165 = por %p163, %p164
    %s167 = sadd.s32 %s166, 1
    %p170 = scmp.eq.s32.totalorder %s13, 1
    %p171 = scmp.ne.s32.totalorder %s166, %s168
    %p172 = scmp.eq.s32.totalorder %s13, 0
    %p173 = por %p171, %p172
    %p174 = scmp.ne.s32.totalorder %s166, %s168
    %p175 = scmp.eq.s32.totalorder %s18, 1
    %p176 = por %p174, %p175
    %p177 = scmp.ne.s32.totalorder %s168, %s169
    %p178 = scmp.eq.s32.totalorder %s18, 0
    %p179 = por %p177, %p178
    %p180 = scmp.ne.s32.totalorder %s168, %s169
    %p181 = scmp.eq.s32.totalorder %s19, 1
    %p182 = por %p180, %p181
    %p184 = scmp.ne.s32.totalorder %s169, %s183
    %p185 = scmp.eq.s32.totalorder %s19, 0
    %p186 = por %p184, %p185
    %s187 = ssub.s32 %s20, %s32
    %s188 = ssub.s32 %s21, %s28
    %s189 = sor.u32 %s187, %s188
    %p190 = scmp.eq.s32.totalorder %s189, 0
    %s192 = sadd.s32 %s191, 1
    %s193 = scalar_select %p190, %s191, %s192
    %p196 = pneg %p190
    %p197 = scmp.eq.s32.totalorder %s13, 1
    %p198 = por %p196, %p197
    %p199 = scmp.ne.s32.totalorder %s191, %s194
    %p200 = scmp.eq.s32.totalorder %s13, 0
    %p201 = por %p199, %p200
    %p202 = scmp.ne.s32.totalorder %s191, %s194
    %p203 = scmp.eq.s32.totalorder %s18, 1
    %p204 = por %p202, %p203
    %p205 = scmp.ne.s32.totalorder %s194, %s195
    %p206 = scmp.eq.s32.totalorder %s18, 0
    %p207 = por %p205, %p206
    %p208 = scmp.ne.s32.totalorder %s194, %s195
    %p209 = scmp.eq.s32.totalorder %s19, 1
    %p210 = por %p208, %p209
    %p212 = scmp.ne.s32.totalorder %s195, %s211
    %p213 = scmp.eq.s32.totalorder %s19, 0
    %p214 = por %p212, %p213
    %p215 = scmp.le.s32.totalorder 1, %s13
    %p216 = scmp.lt.s32.totalorder %s13, 3
    %p217 = pnand %p215, %p216
    %p218 = pneg %p217
    // Predicated region
    $region9: #{shallow_big_forward.1} parent=5 // pred_check
      _
    $region10: #{shallow_big_forward.1} parent=5 // pred_check_branch
      %220 = sbr.rel (%p217) target = $region12
    $region11: #{shallow_big_forward.1} parent=5 // pred_region
      %s221 = ssub.s32 %s13, 1
      // Predicated region
      $region13: #{shallow_big_forward.1} parent=11 // pred_check
        %p222 = pneg %p74
      $region14: #{shallow_big_forward.1} parent=11 // pred_check_branch
        %224 = sbr.rel (%p222) target = $region16
      $region15: #{shallow_big_forward.1} parent=11 // pred_region
        _
      $region16: #{shallow_big_forward.1} parent=11 // pred_fallthru
        _
      // Predicated region
      $region17: #{shallow_big_forward.1} parent=11 // pred_check
        %p225 = pneg %p95
      $region18: #{shallow_big_forward.1} parent=11 // pred_check_branch
        %227 = sbr.rel (%p225) target = $region20
      $region19: #{shallow_big_forward.1} parent=11 // pred_region
        _
      $region20: #{shallow_big_forward.1} parent=11 // pred_fallthru
        _
      // Predicated region
      $region21: #{shallow_big_forward.1} parent=11 // pred_check
        %p228 = pneg %p116
      $region22: #{shallow_big_forward.1} parent=11 // pred_check_branch
        %230 = sbr.rel (%p228) target = $region24
      $region23: #{shallow_big_forward.1} parent=11 // pred_region
        _
      $region24: #{shallow_big_forward.1} parent=11 // pred_fallthru
        _
      // Predicated region
      $region25: #{shallow_big_forward.1} parent=11 // pred_check
        %p231 = pneg %p137
      $region26: #{shallow_big_forward.1} parent=11 // pred_check_branch
        %233 = sbr.rel (%p231) target = $region28
      $region27: #{shallow_big_forward.1} parent=11 // pred_region
        _
      $region28: #{shallow_big_forward.1} parent=11 // pred_fallthru
        _
      // Predicated region
      $region29: #{shallow_big_forward.1} parent=11 // pred_check
        %p234 = pneg %p158
      $region30: #{shallow_big_forward.1} parent=11 // pred_check_branch
        %236 = sbr.rel (%p234) target = $region32
      $region31: #{shallow_big_forward.1} parent=11 // pred_region
        _
      $region32: #{shallow_big_forward.1} parent=11 // pred_fallthru
        _
      // Predicated region
      $region33: #{shallow_big_forward.1} parent=11 // pred_check
        %p237 = pneg %p179
      $region34: #{shallow_big_forward.1} parent=11 // pred_check_branch
        %239 = sbr.rel (%p237) target = $region36
      $region35: #{shallow_big_forward.1} parent=11 // pred_region
        _
      $region36: #{shallow_big_forward.1} parent=11 // pred_fallthru
        _
    $region12: #{shallow_big_forward.1} parent=5 // pred_fallthru
      _
    %p240 = scmp.lt.s32.totalorder %s13, 2
    // Predicated region
    $region37: #{shallow_big_forward.1} parent=5 // pred_check
      %p241 = pneg %p240
    $region38: #{shallow_big_forward.1} parent=5 // pred_check_branch
      %243 = sbr.rel (%p241) target = $region40
    $region39: #{shallow_big_forward.1} parent=5 // pred_region
      // Predicated region
      $region41: #{shallow_big_forward.1} parent=39 // pred_check
        %p244 = pneg %p47
      $region42: #{shallow_big_forward.1} parent=39 // pred_check_branch
        %246 = sbr.rel (%p244) target = $region44
      $region43: #{shallow_big_forward.1} parent=39 // pred_region
        %s247 = smul.u32 2, %s21
        %p248 = scmp.lt.s32.totalorder %s20, 1
        %s249 = scalar_select %p248, %s20, 1
        %p250 = scmp.lt.s32.totalorder %s247, 1
        %s251 = scalar_select %p250, %s247, 1
        %s252 = smul.addr %s249, 2
        %s253 = sadd.s32 %s251, %s252
        %s254 = smul.addr %s253, 8
        %s255 = scalar_lea.vmem %s0, %s254
        %s256 = smul.u32 2, %s21
      $region44: #{shallow_big_forward.1} parent=39 // pred_fallthru
        _
    $region40: #{shallow_big_forward.1} parent=5 // pred_fallthru
      _
    %p257 = scmp.le.s32.totalorder 1, %s13
    %p258 = scmp.lt.s32.totalorder %s13, 3
    %p259 = pnand %p257, %p258
    %p260 = pneg %p259
    // Predicated region
    $region45: #{shallow_big_forward.1} parent=5 // pred_check
      _
    $region46: #{shallow_big_forward.1} parent=5 // pred_check_branch
      %262 = sbr.rel (%p259) target = $region48
    $region47: #{shallow_big_forward.1} parent=5 // pred_region
      %s263 = ssub.s32 %s13, 1
      %s264 = smul.u32 2, %s23
      %p265 = scmp.lt.s32.totalorder %s22, 1
      %s266 = scalar_select %p265, %s22, 1
      %p267 = scmp.lt.s32.totalorder %s264, 1
      %s268 = scalar_select %p267, %s264, 1
      %s269 = smul.addr %s266, 2
      %s270 = sadd.s32 %s268, %s269
      %s271 = smul.addr %s270, 8
      %s272 = scalar_lea.vmem %s0, %s271
      %p273 = pneg %p53
      %p274 = pneg %p50
      %p275 = pneg %p74
      %p276 = pneg %p71
      %p277 = pneg %p95
      %p278 = pneg %p92
      %p279 = pneg %p116
      %p280 = pneg %p113
      %p281 = pneg %p137
      %p282 = pneg %p134
      %p283 = pneg %p158
      %p284 = pneg %p155
      %p285 = pneg %p179
      %p286 = pneg %p176
      %p287 = pneg %p207
      %p288 = pneg %p204
      %s289 = smul.u32 2, %s23
      %p290 = scmp.lt.s32.totalorder %s22, 1
      %s291 = scalar_select %p290, %s22, 1
      %p292 = scmp.lt.s32.totalorder %s289, 1
      %s293 = scalar_select %p292, %s289, 1
      %s294 = smul.addr %s291, 6
      %s295 = sadd.s32 %s293, %s294
      %s296 = smul.addr %s295, 8
      %s297 = scalar_lea.vmem %s7, %s296
      %s298 = smul.u32 2, %s23
      %p299 = scmp.lt.s32.totalorder %s22, 1
      %s300 = scalar_select %p299, %s22, 1
      %p301 = scmp.lt.s32.totalorder %s298, 1
      %s302 = scalar_select %p301, %s298, 1
      %s303 = smul.addr %s300, 2
      %s304 = sadd.s32 %s302, %s303
      %s305 = smul.addr %s304, 8
      %s306 = scalar_lea.vmem %s0, %s305
      %s307 = smul.u32 2, %s23
      %s308 = smul.u32 2, %s23
      %p309 = scmp.lt.s32.totalorder %s22, 1
      %s310 = scalar_select %p309, %s22, 1
      %p311 = scmp.lt.s32.totalorder %s308, 1
      %s312 = scalar_select %p311, %s308, 1
      %s313 = smul.addr %s310, 6
      %s314 = sadd.s32 %s312, %s313
      %s315 = smul.addr %s314, 8
      %s316 = scalar_lea.vmem %s7, %s315
      %s317 = smul.u32 2, %s23
      %v319 = vld [vmem:[%s306] sm:$0xff]
      %v320 = vld [vmem:[%s306 + $0x8] sm:$0xff]
      %v321 = vpack.c.bf16 %v319, %v319
      %v322 = vpack.c.bf16 %v320, %v320
      %v323 = vld [vmem:[%s1] sm:$0xf]
      %v324 = vld [vmem:[%s1 + $0x4] sm:$0xf]
      %v325 = vld [vmem:[%s1 + $0x8] sm:$0xf]
      %v326 = vld [vmem:[%s1 + $0xc] sm:$0xf]
      %v327 = vld [vmem:[%s1 + $0x10] sm:$0xf]
      %v328 = vld [vmem:[%s1 + $0x14] sm:$0xf]
      %v329 = vld [vmem:[%s1 + $0x18] sm:$0xf]
      %v330 = vld [vmem:[%s1 + $0x1c] sm:$0xf]
      %v331 = vld [vmem:[%s1 + $0x20] sm:$0xf]
      %v332 = vld [vmem:[%s1 + $0x24] sm:$0xf]
      %v333 = vld [vmem:[%s1 + $0x28] sm:$0xf]
      %v334 = vld [vmem:[%s1 + $0x2c] sm:$0xf]
      %v335 = vld [vmem:[%s1 + $0x30] sm:$0xf]
      %v336 = vld [vmem:[%s1 + $0x34] sm:$0xf]
      %v337 = vld [vmem:[%s1 + $0x38] sm:$0xf]
      %v338 = vld [vmem:[%s1 + $0x3c] sm:$0xf]
      %v339 = vld [vmem:[%s1 + $0x40] sm:$0xf]
      %v340 = vld [vmem:[%s1 + $0x44] sm:$0xf]
      %v341 = vld [vmem:[%s1 + $0x48] sm:$0xf]
      %v342 = vld [vmem:[%s1 + $0x4c] sm:$0xf]
      %v343 = vld [vmem:[%s1 + $0x50] sm:$0xf]
      %v344 = vld [vmem:[%s1 + $0x54] sm:$0xf]
      %v345 = vld [vmem:[%s1 + $0x58] sm:$0xf]
      %v346 = vld [vmem:[%s1 + $0x5c] sm:$0xf]
      %v347 = vld [vmem:[%s1 + $0x60] sm:$0xf]
      %v348 = vld [vmem:[%s1 + $0x64] sm:$0xf]
      %v349 = vld [vmem:[%s1 + $0x68] sm:$0xf]
      %v350 = vld [vmem:[%s1 + $0x6c] sm:$0xf]
      %v351 = vld [vmem:[%s1 + $0x70] sm:$0xf]
      %v352 = vld [vmem:[%s1 + $0x74] sm:$0xf]
      %v353 = vld [vmem:[%s1 + $0x78] sm:$0xf]
      %v354 = vld [vmem:[%s1 + $0x7c] sm:$0xf]
      %v355 = vld [vmem:[%s2] sm:$0xff]
      %v356 = vld [vmem:[%s2 + $0x8] sm:$0xff]
      %v357 = vld [vmem:[%s2 + $0x10] sm:$0xff]
      %v358 = vld [vmem:[%s2 + $0x18] sm:$0xff]
      %v359 = vld [vmem:[%s2 + $0x20] sm:$0xff]
      %v360 = vld [vmem:[%s2 + $0x28] sm:$0xff]
      %v361 = vld [vmem:[%s2 + $0x30] sm:$0xff]
      %v362 = vld [vmem:[%s2 + $0x38] sm:$0xff]
      %v363 = vld [vmem:[%s2 + $0x40] sm:$0xff]
      %v364 = vld [vmem:[%s2 + $0x48] sm:$0xff]
      %v365 = vld [vmem:[%s2 + $0x50] sm:$0xff]
      %v366 = vld [vmem:[%s2 + $0x58] sm:$0xff]
      %v367 = vld [vmem:[%s2 + $0x60] sm:$0xff]
      %v368 = vld [vmem:[%s2 + $0x68] sm:$0xff]
      %v369 = vld [vmem:[%s2 + $0x70] sm:$0xff]
      %v370 = vld [vmem:[%s2 + $0x78] sm:$0xff]
      %v371 = vld [vmem:[%s2 + $0x80] sm:$0xff]
      %v372 = vld [vmem:[%s2 + $0x88] sm:$0xff]
      %v373 = vld [vmem:[%s2 + $0x90] sm:$0xff]
      %v374 = vld [vmem:[%s2 + $0x98] sm:$0xff]
      %v375 = vld [vmem:[%s2 + $0xa0] sm:$0xff]
      %v376 = vld [vmem:[%s2 + $0xa8] sm:$0xff]
      %v377 = vld [vmem:[%s2 + $0xb0] sm:$0xff]
      %v378 = vld [vmem:[%s2 + $0xb8] sm:$0xff]
      %v379 = vld [vmem:[%s2 + $0xc0] sm:$0xff]
      %v380 = vld [vmem:[%s2 + $0xc8] sm:$0xff]
      %v381 = vld [vmem:[%s2 + $0xd0] sm:$0xff]
      %v382 = vld [vmem:[%s2 + $0xd8] sm:$0xff]
      %v383 = vld [vmem:[%s2 + $0xe0] sm:$0xff]
      %v384 = vld [vmem:[%s2 + $0xe8] sm:$0xff]
      %v385 = vld [vmem:[%s2 + $0xf0] sm:$0xff]
      %v386 = vld [vmem:[%s2 + $0xf8] sm:$0xff]
      %388 = vset.pattern.permute.xlu0 0
      %389 = vperm.xlu0 %388, %v355
      %v390 = vpop.permute.xlu0 %389
      %393 = vset.pattern.permute.xlu0 0
      %394 = vperm.xlu0 %393, %v356
      %v395 = vpop.permute.xlu0 %394
      %398 = vset.pattern.permute.xlu0 0
      %399 = vperm.xlu0 %398, %v357
      %v400 = vpop.permute.xlu0 %399
      %403 = vset.pattern.permute.xlu0 0
      %404 = vperm.xlu0 %403, %v358
      %v405 = vpop.permute.xlu0 %404
      %408 = vset.pattern.permute.xlu0 0
      %409 = vperm.xlu0 %408, %v359
      %v410 = vpop.permute.xlu0 %409
      %413 = vset.pattern.permute.xlu0 0
      %414 = vperm.xlu0 %413, %v360
      %v415 = vpop.permute.xlu0 %414
      %418 = vset.pattern.permute.xlu0 0
      %419 = vperm.xlu0 %418, %v361
      %v420 = vpop.permute.xlu0 %419
      %423 = vset.pattern.permute.xlu0 0
      %424 = vperm.xlu0 %423, %v362
      %v425 = vpop.permute.xlu0 %424
      %428 = vset.pattern.permute.xlu0 0
      %429 = vperm.xlu0 %428, %v363
      %v430 = vpop.permute.xlu0 %429
      %433 = vset.pattern.permute.xlu0 0
      %434 = vperm.xlu0 %433, %v364
      %v435 = vpop.permute.xlu0 %434
      %438 = vset.pattern.permute.xlu0 0
      %439 = vperm.xlu0 %438, %v365
      %v440 = vpop.permute.xlu0 %439
      %443 = vset.pattern.permute.xlu0 0
      %444 = vperm.xlu0 %443, %v366
      %v445 = vpop.permute.xlu0 %444
      %448 = vset.pattern.permute.xlu0 0
      %449 = vperm.xlu0 %448, %v367
      %v450 = vpop.permute.xlu0 %449
      %453 = vset.pattern.permute.xlu0 0
      %454 = vperm.xlu0 %453, %v368
      %v455 = vpop.permute.xlu0 %454
      %458 = vset.pattern.permute.xlu0 0
      %459 = vperm.xlu0 %458, %v369
      %v460 = vpop.permute.xlu0 %459
      %463 = vset.pattern.permute.xlu0 0
      %464 = vperm.xlu0 %463, %v370
      %v465 = vpop.permute.xlu0 %464
      %468 = vset.pattern.permute.xlu0 0
      %469 = vperm.xlu0 %468, %v371
      %v470 = vpop.permute.xlu0 %469
      %473 = vset.pattern.permute.xlu0 0
      %474 = vperm.xlu0 %473, %v372
      %v475 = vpop.permute.xlu0 %474
      %478 = vset.pattern.permute.xlu0 0
      %479 = vperm.xlu0 %478, %v373
      %v480 = vpop.permute.xlu0 %479
      %483 = vset.pattern.permute.xlu0 0
      %484 = vperm.xlu0 %483, %v374
      %v485 = vpop.permute.xlu0 %484
      %488 = vset.pattern.permute.xlu0 0
      %489 = vperm.xlu0 %488, %v375
      %v490 = vpop.permute.xlu0 %489
      %493 = vset.pattern.permute.xlu0 0
      %494 = vperm.xlu0 %493, %v376
      %v495 = vpop.permute.xlu0 %494
      %498 = vset.pattern.permute.xlu0 0
      %499 = vperm.xlu0 %498, %v377
      %v500 = vpop.permute.xlu0 %499
      %503 = vset.pattern.permute.xlu0 0
      %504 = vperm.xlu0 %503, %v378
      %v505 = vpop.permute.xlu0 %504
      %508 = vset.pattern.permute.xlu0 0
      %509 = vperm.xlu0 %508, %v379
      %v510 = vpop.permute.xlu0 %509
      %513 = vset.pattern.permute.xlu0 0
      %514 = vperm.xlu0 %513, %v380
      %v515 = vpop.permute.xlu0 %514
      %518 = vset.pattern.permute.xlu0 0
      %519 = vperm.xlu0 %518, %v381
      %v520 = vpop.permute.xlu0 %519
      %523 = vset.pattern.permute.xlu0 0
      %524 = vperm.xlu0 %523, %v382
      %v525 = vpop.permute.xlu0 %524
      %528 = vset.pattern.permute.xlu0 0
      %529 = vperm.xlu0 %528, %v383
      %v530 = vpop.permute.xlu0 %529
      %533 = vset.pattern.permute.xlu0 0
      %534 = vperm.xlu0 %533, %v384
      %v535 = vpop.permute.xlu0 %534
      %538 = vset.pattern.permute.xlu0 0
      %539 = vperm.xlu0 %538, %v385
      %v540 = vpop.permute.xlu0 %539
      %543 = vset.pattern.permute.xlu0 0
      %544 = vperm.xlu0 %543, %v386
      %v545 = vpop.permute.xlu0 %544
      %v579 = vunpack.c.l.b16 %v323
      %v580 = vunpack.c.l.b16 %v324
      %v581 = vunpack.c.l.b16 %v325
      %v582 = vunpack.c.l.b16 %v326
      %v583 = vunpack.c.l.b16 %v327
      %v584 = vunpack.c.l.b16 %v328
      %v585 = vunpack.c.l.b16 %v329
      %v586 = vunpack.c.l.b16 %v330
      %v587 = vunpack.c.l.b16 %v331
      %v588 = vunpack.c.l.b16 %v332
      %v589 = vunpack.c.l.b16 %v333
      %v590 = vunpack.c.l.b16 %v334
      %v591 = vunpack.c.l.b16 %v335
      %v592 = vunpack.c.l.b16 %v336
      %v593 = vunpack.c.l.b16 %v337
      %v594 = vunpack.c.l.b16 %v338
      %v595 = vunpack.c.l.b16 %v339
      %v596 = vunpack.c.l.b16 %v340
      %v597 = vunpack.c.l.b16 %v341
      %v598 = vunpack.c.l.b16 %v342
      %v599 = vunpack.c.l.b16 %v343
      %v600 = vunpack.c.l.b16 %v344
      %v601 = vunpack.c.l.b16 %v345
      %v602 = vunpack.c.l.b16 %v346
      %v603 = vunpack.c.l.b16 %v347
      %v604 = vunpack.c.l.b16 %v348
      %v605 = vunpack.c.l.b16 %v349
      %v606 = vunpack.c.l.b16 %v350
      %v607 = vunpack.c.l.b16 %v351
      %v608 = vunpack.c.l.b16 %v352
      %v609 = vunpack.c.l.b16 %v353
      %v610 = vunpack.c.l.b16 %v354
      %v611 = vpack.c.b16 %v580, %v579
      %v612 = vpack.c.b16 %v582, %v581
      %v613 = vpack.c.b16 %v584, %v583
      %v614 = vpack.c.b16 %v586, %v585
      %v615 = vpack.c.b16 %v588, %v587
      %v616 = vpack.c.b16 %v590, %v589
      %v617 = vpack.c.b16 %v592, %v591
      %v618 = vpack.c.b16 %v594, %v593
      %v619 = vpack.c.b16 %v596, %v595
      %v620 = vpack.c.b16 %v598, %v597
      %v621 = vpack.c.b16 %v600, %v599
      %v622 = vpack.c.b16 %v602, %v601
      %v623 = vpack.c.b16 %v604, %v603
      %v624 = vpack.c.b16 %v606, %v605
      %v625 = vpack.c.b16 %v608, %v607
      %v626 = vpack.c.b16 %v610, %v609
      %vm627 = vcmask 64512
      %v629 = vsel %vm627, %v611, 0
      %v632 = vsel %vm627, %v612, 0
      %v635 = vsel %vm627, %v613, 0
      %v638 = vsel %vm627, %v614, 0
      %v641 = vsel %vm627, %v615, 0
      %v644 = vsel %vm627, %v616, 0
      %v647 = vsel %vm627, %v617, 0
      %v650 = vsel %vm627, %v618, 0
      %v653 = vsel %vm627, %v619, 0
      %v656 = vsel %vm627, %v620, 0
      %v659 = vsel %vm627, %v621, 0
      %v662 = vsel %vm627, %v622, 0
      %v665 = vsel %vm627, %v623, 0
      %v668 = vsel %vm627, %v624, 0
      %v671 = vsel %vm627, %v625, 0
      %v674 = vsel %vm627, %v626, 0
      %vm676 = vcmask 1043456
      %v678 = vsel %vm676, %v321, 0
      %v681 = vsel %vm676, %v322, 0
      %683 = vmatprep.subr.bf16.mxu0 0
      %684 = vmatpush1.bf16.msra.mxu0 0
      %685 = vmatprep.subr.bf16.mxu0 0
      %686 = vmatpush1.bf16.msra.mxu0 0
      %687 = vmatprep.subr.bf16.mxu0 0
      %688 = vmatpush1.bf16.msra.mxu0 0
      %689 = vmatprep.subr.bf16.mxu0 0
      %690 = vmatpush1.bf16.msra.mxu0 0
      %691 = vmatprep.subr.bf16.mxu0 0
      %692 = vmatpush1.bf16.msra.mxu0 0
      %693 = vmatprep.subr.bf16.mxu0 0
      %694 = vmatpush1.bf16.msra.mxu0 0
      %695 = vmatprep.subr.bf16.mxu0 0
      %696 = vmatpush1.bf16.msra.mxu0 0
      %697 = vmatprep.subr.bf16.mxu0 %v681
      %698 = vmatpush1.bf16.msra.mxu0 %v678
      %699 = vmatprep.subr.bf16.mxu0 0
      %700 = vmatpush2.bf16.msra.mxu0 0
      %701 = vmatprep.subr.bf16.mxu0 0
      %702 = vmatpush2.bf16.msra.mxu0 0
      %703 = vmatprep.subr.bf16.mxu0 0
      %704 = vmatpush2.bf16.msra.mxu0 0
      %705 = vmatprep.subr.bf16.mxu0 0
      %706 = vmatpush2.bf16.msra.mxu0 0
      %707 = vmatprep.subr.bf16.mxu0 0
      %708 = vmatpush2.bf16.msra.mxu0 0
      %709 = vmatprep.subr.bf16.mxu0 0
      %710 = vmatpush2.bf16.msra.mxu0 0
      %711 = vmatprep.subr.bf16.mxu0 0
      %712 = vmatpush2.bf16.msra.mxu0 0
      %713 = vmatprep.subr.bf16.mxu0 0
      %714 = vmatpush2.bf16.msra.mxu0 0
      %715 = vmatprep.mubr.bf16.mxu0 0
      %716 = vmatmul.mubr.bf16.gmra.mxu0 %v629
      %v717 = vpop.f32.mrf.mxu0
      %v718 = vadd.f32 %v390, %v717
      %v719 = vpop.f32.mrf.mxu0
      %v720 = vadd.f32 %v390, %v719
      %v721 = vpop.f32.mrf.mxu0
      %v722 = vadd.f32 %v395, %v721
      %v723 = vpop.f32.mrf.mxu0
      %v724 = vadd.f32 %v395, %v723
      %725 = vmatprep.mubr.bf16.mxu0 0
      %726 = vmatmul.mubr.bf16.gmra.mxu0 %v632
      %v727 = vpop.f32.mrf.mxu0
      %v728 = vadd.f32 %v400, %v727
      %v729 = vpop.f32.mrf.mxu0
      %v730 = vadd.f32 %v400, %v729
      %v731 = vpop.f32.mrf.mxu0
      %v732 = vadd.f32 %v405, %v731
      %v733 = vpop.f32.mrf.mxu0
      %v734 = vadd.f32 %v405, %v733
      %735 = vmatprep.mubr.bf16.mxu0 0
      %736 = vmatmul.mubr.bf16.gmra.mxu0 %v635
      %v737 = vpop.f32.mrf.mxu0
      %v738 = vadd.f32 %v410, %v737
      %v739 = vpop.f32.mrf.mxu0
      %v740 = vadd.f32 %v410, %v739
      %v741 = vpop.f32.mrf.mxu0
      %v742 = vadd.f32 %v415, %v741
      %v743 = vpop.f32.mrf.mxu0
      %v744 = vadd.f32 %v415, %v743
      %745 = vmatprep.mubr.bf16.mxu0 0
      %746 = vmatmul.mubr.bf16.gmra.mxu0 %v638
      %v747 = vpop.f32.mrf.mxu0
      %v748 = vadd.f32 %v420, %v747
      %v749 = vpop.f32.mrf.mxu0
      %v750 = vadd.f32 %v420, %v749
      %v751 = vpop.f32.mrf.mxu0
      %v752 = vadd.f32 %v425, %v751
      %v753 = vpop.f32.mrf.mxu0
      %v754 = vadd.f32 %v425, %v753
      %755 = vmatprep.mubr.bf16.mxu0 0
      %756 = vmatmul.mubr.bf16.gmra.mxu0 %v641
      %v757 = vpop.f32.mrf.mxu0
      %v758 = vadd.f32 %v430, %v757
      %v759 = vpop.f32.mrf.mxu0
      %v760 = vadd.f32 %v430, %v759
      %v761 = vpop.f32.mrf.mxu0
      %v762 = vadd.f32 %v435, %v761
      %v763 = vpop.f32.mrf.mxu0
      %v764 = vadd.f32 %v435, %v763
      %765 = vmatprep.mubr.bf16.mxu0 0
      %766 = vmatmul.mubr.bf16.gmra.mxu0 %v644
      %v767 = vpop.f32.mrf.mxu0
      %v768 = vadd.f32 %v440, %v767
      %v769 = vpop.f32.mrf.mxu0
      %v770 = vadd.f32 %v440, %v769
      %v771 = vpop.f32.mrf.mxu0
      %v772 = vadd.f32 %v445, %v771
      %v773 = vpop.f32.mrf.mxu0
      %v774 = vadd.f32 %v445, %v773
      %775 = vmatprep.mubr.bf16.mxu0 0
      %776 = vmatmul.mubr.bf16.gmra.mxu0 %v647
      %v777 = vpop.f32.mrf.mxu0
      %v778 = vadd.f32 %v450, %v777
      %v779 = vpop.f32.mrf.mxu0
      %v780 = vadd.f32 %v450, %v779
      %v781 = vpop.f32.mrf.mxu0
      %v782 = vadd.f32 %v455, %v781
      %v783 = vpop.f32.mrf.mxu0
      %v784 = vadd.f32 %v455, %v783
      %785 = vmatprep.mubr.bf16.mxu0 0
      %786 = vmatmul.mubr.bf16.gmra.mxu0 %v650
      %v787 = vpop.f32.mrf.mxu0
      %v788 = vadd.f32 %v460, %v787
      %v789 = vpop.f32.mrf.mxu0
      %v790 = vadd.f32 %v460, %v789
      %v791 = vpop.f32.mrf.mxu0
      %v792 = vadd.f32 %v465, %v791
      %v793 = vpop.f32.mrf.mxu0
      %v794 = vadd.f32 %v465, %v793
      %795 = vmatprep.mubr.bf16.mxu0 0
      %796 = vmatmul.mubr.bf16.gmra.mxu0 %v653
      %v797 = vpop.f32.mrf.mxu0
      %v798 = vadd.f32 %v470, %v797
      %v799 = vpop.f32.mrf.mxu0
      %v800 = vadd.f32 %v470, %v799
      %v801 = vpop.f32.mrf.mxu0
      %v802 = vadd.f32 %v475, %v801
      %v803 = vpop.f32.mrf.mxu0
      %v804 = vadd.f32 %v475, %v803
      %805 = vmatprep.mubr.bf16.mxu0 0
      %806 = vmatmul.mubr.bf16.gmra.mxu0 %v656
      %v807 = vpop.f32.mrf.mxu0
      %v808 = vadd.f32 %v480, %v807
      %v809 = vpop.f32.mrf.mxu0
      %v810 = vadd.f32 %v480, %v809
      %v811 = vpop.f32.mrf.mxu0
      %v812 = vadd.f32 %v485, %v811
      %v813 = vpop.f32.mrf.mxu0
      %v814 = vadd.f32 %v485, %v813
      %815 = vmatprep.mubr.bf16.mxu0 0
      %816 = vmatmul.mubr.bf16.gmra.mxu0 %v659
      %v817 = vpop.f32.mrf.mxu0
      %v818 = vadd.f32 %v490, %v817
      %v819 = vpop.f32.mrf.mxu0
      %v820 = vadd.f32 %v490, %v819
      %v821 = vpop.f32.mrf.mxu0
      %v822 = vadd.f32 %v495, %v821
      %v823 = vpop.f32.mrf.mxu0
      %v824 = vadd.f32 %v495, %v823
      %825 = vmatprep.mubr.bf16.mxu0 0
      %826 = vmatmul.mubr.bf16.gmra.mxu0 %v662
      %v827 = vpop.f32.mrf.mxu0
      %v828 = vadd.f32 %v500, %v827
      %v829 = vpop.f32.mrf.mxu0
      %v830 = vadd.f32 %v500, %v829
      %v831 = vpop.f32.mrf.mxu0
      %v832 = vadd.f32 %v505, %v831
      %v833 = vpop.f32.mrf.mxu0
      %v834 = vadd.f32 %v505, %v833
      %835 = vmatprep.mubr.bf16.mxu0 0
      %836 = vmatmul.mubr.bf16.gmra.mxu0 %v665
      %v837 = vpop.f32.mrf.mxu0
      %v838 = vadd.f32 %v510, %v837
      %v839 = vpop.f32.mrf.mxu0
      %v840 = vadd.f32 %v510, %v839
      %v841 = vpop.f32.mrf.mxu0
      %v842 = vadd.f32 %v515, %v841
      %v843 = vpop.f32.mrf.mxu0
      %v844 = vadd.f32 %v515, %v843
      %845 = vmatprep.mubr.bf16.mxu0 0
      %846 = vmatmul.mubr.bf16.gmra.mxu0 %v668
      %v847 = vpop.f32.mrf.mxu0
      %v848 = vadd.f32 %v520, %v847
      %v849 = vpop.f32.mrf.mxu0
      %v850 = vadd.f32 %v520, %v849
      %v851 = vpop.f32.mrf.mxu0
      %v852 = vadd.f32 %v525, %v851
      %v853 = vpop.f32.mrf.mxu0
      %v854 = vadd.f32 %v525, %v853
      %855 = vmatprep.mubr.bf16.mxu0 0
      %856 = vmatmul.mubr.bf16.gmra.mxu0 %v671
      %v857 = vpop.f32.mrf.mxu0
      %v858 = vadd.f32 %v530, %v857
      %v859 = vpop.f32.mrf.mxu0
      %v860 = vadd.f32 %v530, %v859
      %v861 = vpop.f32.mrf.mxu0
      %v862 = vadd.f32 %v535, %v861
      %v863 = vpop.f32.mrf.mxu0
      %v864 = vadd.f32 %v535, %v863
      %865 = vmatprep.mubr.bf16.mxu0 0
      %866 = vmatmul.mubr.bf16.gmra.mxu0 %v674
      %v867 = vpop.f32.mrf.mxu0
      %v868 = vadd.f32 %v540, %v867
      %v869 = vpop.f32.mrf.mxu0
      %v870 = vadd.f32 %v540, %v869
      %v871 = vpop.f32.mrf.mxu0
      %v872 = vadd.f32 %v545, %v871
      %v873 = vpop.f32.mrf.mxu0
      %v874 = vadd.f32 %v545, %v873
      %875 = vdwg.mxu0
      %v876 = vmax.f32 %v718, 0.0
      %v877 = vmax.f32 %v720, 0.0
      %v878 = vmax.f32 %v722, 0.0
      %v879 = vmax.f32 %v724, 0.0
      %v880 = vmax.f32 %v728, 0.0
      %v881 = vmax.f32 %v730, 0.0
      %v882 = vmax.f32 %v732, 0.0
      %v883 = vmax.f32 %v734, 0.0
      %v884 = vmax.f32 %v738, 0.0
      %v885 = vmax.f32 %v740, 0.0
      %v886 = vmax.f32 %v742, 0.0
      %v887 = vmax.f32 %v744, 0.0
      %v888 = vmax.f32 %v748, 0.0
      %v889 = vmax.f32 %v750, 0.0
      %v890 = vmax.f32 %v752, 0.0
      %v891 = vmax.f32 %v754, 0.0
      %v892 = vmax.f32 %v758, 0.0
      %v893 = vmax.f32 %v760, 0.0
      %v894 = vmax.f32 %v762, 0.0
      %v895 = vmax.f32 %v764, 0.0
      %v896 = vmax.f32 %v768, 0.0
      %v897 = vmax.f32 %v770, 0.0
      %v898 = vmax.f32 %v772, 0.0
      %v899 = vmax.f32 %v774, 0.0
      %v900 = vmax.f32 %v778, 0.0
      %v901 = vmax.f32 %v780, 0.0
      %v902 = vmax.f32 %v782, 0.0
      %v903 = vmax.f32 %v784, 0.0
      %v904 = vmax.f32 %v788, 0.0
      %v905 = vmax.f32 %v790, 0.0
      %v906 = vmax.f32 %v792, 0.0
      %v907 = vmax.f32 %v794, 0.0
      %v908 = vmax.f32 %v798, 0.0
      %v909 = vmax.f32 %v800, 0.0
      %v910 = vmax.f32 %v802, 0.0
      %v911 = vmax.f32 %v804, 0.0
      %v912 = vmax.f32 %v808, 0.0
      %v913 = vmax.f32 %v810, 0.0
      %v914 = vmax.f32 %v812, 0.0
      %v915 = vmax.f32 %v814, 0.0
      %v916 = vmax.f32 %v818, 0.0
      %v917 = vmax.f32 %v820, 0.0
      %v918 = vmax.f32 %v822, 0.0
      %v919 = vmax.f32 %v824, 0.0
      %v920 = vmax.f32 %v828, 0.0
      %v921 = vmax.f32 %v830, 0.0
      %v922 = vmax.f32 %v832, 0.0
      %v923 = vmax.f32 %v834, 0.0
      %v924 = vmax.f32 %v838, 0.0
      %v925 = vmax.f32 %v840, 0.0
      %v926 = vmax.f32 %v842, 0.0
      %v927 = vmax.f32 %v844, 0.0
      %v928 = vmax.f32 %v848, 0.0
      %v929 = vmax.f32 %v850, 0.0
      %v930 = vmax.f32 %v852, 0.0
      %v931 = vmax.f32 %v854, 0.0
      %v932 = vmax.f32 %v858, 0.0
      %v933 = vmax.f32 %v860, 0.0
      %v934 = vmax.f32 %v862, 0.0
      %v935 = vmax.f32 %v864, 0.0
      %v936 = vmax.f32 %v868, 0.0
      %v937 = vmax.f32 %v870, 0.0
      %v938 = vmax.f32 %v872, 0.0
      %v939 = vmax.f32 %v874, 0.0
      %v940 = vld [vmem:[%s3] sm:$0xff]
      %v941 = vld [vmem:[%s3 + $0x8] sm:$0xff]
      %v942 = vld [vmem:[%s3 + $0x10] sm:$0xff]
      %v943 = vld [vmem:[%s3 + $0x18] sm:$0xff]
      %v944 = vld [vmem:[%s3 + $0x20] sm:$0xff]
      %v945 = vld [vmem:[%s3 + $0x28] sm:$0xff]
      %v946 = vld [vmem:[%s3 + $0x30] sm:$0xff]
      %v947 = vld [vmem:[%s3 + $0x38] sm:$0xff]
      %v948 = vld [vmem:[%s3 + $0x40] sm:$0xff]
      %v949 = vld [vmem:[%s3 + $0x48] sm:$0xff]
      %v950 = vld [vmem:[%s3 + $0x50] sm:$0xff]
      %v951 = vld [vmem:[%s3 + $0x58] sm:$0xff]
      %v952 = vld [vmem:[%s3 + $0x60] sm:$0xff]
      %v953 = vld [vmem:[%s3 + $0x68] sm:$0xff]
      %v954 = vld [vmem:[%s3 + $0x70] sm:$0xff]
      %v955 = vld [vmem:[%s3 + $0x78] sm:$0xff]
      %v956 = vpack.c.bf16 %v878, %v876
      %v957 = vpack.c.bf16 %v879, %v877
      %v958 = vpack.c.bf16 %v882, %v880
      %v959 = vpack.c.bf16 %v883, %v881
      %v960 = vpack.c.bf16 %v886, %v884
      %v961 = vpack.c.bf16 %v887, %v885
      %v962 = vpack.c.bf16 %v890, %v888
      %v963 = vpack.c.bf16 %v891, %v889
      %v964 = vpack.c.bf16 %v894, %v892
      %v965 = vpack.c.bf16 %v895, %v893
      %v966 = vpack.c.bf16 %v898, %v896
      %v967 = vpack.c.bf16 %v899, %v897
      %v968 = vpack.c.bf16 %v902, %v900
      %v969 = vpack.c.bf16 %v903, %v901
      %v970 = vpack.c.bf16 %v906, %v904
      %v971 = vpack.c.bf16 %v907, %v905
      %v972 = vpack.c.bf16 %v910, %v908
      %v973 = vpack.c.bf16 %v911, %v909
      %v974 = vpack.c.bf16 %v914, %v912
      %v975 = vpack.c.bf16 %v915, %v913
      %v976 = vpack.c.bf16 %v918, %v916
      %v977 = vpack.c.bf16 %v919, %v917
      %v978 = vpack.c.bf16 %v922, %v920
      %v979 = vpack.c.bf16 %v923, %v921
      %v980 = vpack.c.bf16 %v926, %v924
      %v981 = vpack.c.bf16 %v927, %v925
      %v982 = vpack.c.bf16 %v930, %v928
      %v983 = vpack.c.bf16 %v931, %v929
      %v984 = vpack.c.bf16 %v934, %v932
      %v985 = vpack.c.bf16 %v935, %v933
      %v986 = vpack.c.bf16 %v938, %v936
      %v987 = vpack.c.bf16 %v939, %v937
      %v988 = vld [vmem:[%s4] sm:$0xff]
      %v989 = vld [vmem:[%s4 + $0x8] sm:$0xff]
      %v990 = vld [vmem:[%s4 + $0x10] sm:$0xff]
      %v991 = vld [vmem:[%s4 + $0x18] sm:$0xff]
      %v992 = vld [vmem:[%s4 + $0x20] sm:$0xff]
      %v993 = vld [vmem:[%s4 + $0x28] sm:$0xff]
      %v994 = vld [vmem:[%s4 + $0x30] sm:$0xff]
      %v995 = vld [vmem:[%s4 + $0x38] sm:$0xff]
      %v996 = vld [vmem:[%s4 + $0x40] sm:$0xff]
      %v997 = vld [vmem:[%s4 + $0x48] sm:$0xff]
      %v998 = vld [vmem:[%s4 + $0x50] sm:$0xff]
      %v999 = vld [vmem:[%s4 + $0x58] sm:$0xff]
      %v1000 = vld [vmem:[%s4 + $0x60] sm:$0xff]
      %v1001 = vld [vmem:[%s4 + $0x68] sm:$0xff]
      %v1002 = vld [vmem:[%s4 + $0x70] sm:$0xff]
      %v1003 = vld [vmem:[%s4 + $0x78] sm:$0xff]
      %1005 = vset.pattern.permute.xlu0 0
      %1006 = vperm.xlu0 %1005, %v988
      %v1007 = vpop.permute.xlu0 %1006
      %1010 = vset.pattern.permute.xlu0 0
      %1011 = vperm.xlu0 %1010, %v989
      %v1012 = vpop.permute.xlu0 %1011
      %1015 = vset.pattern.permute.xlu0 0
      %1016 = vperm.xlu0 %1015, %v990
      %v1017 = vpop.permute.xlu0 %1016
      %1020 = vset.pattern.permute.xlu0 0
      %1021 = vperm.xlu0 %1020, %v991
      %v1022 = vpop.permute.xlu0 %1021
      %1025 = vset.pattern.permute.xlu0 0
      %1026 = vperm.xlu0 %1025, %v992
      %v1027 = vpop.permute.xlu0 %1026
      %1030 = vset.pattern.permute.xlu0 0
      %1031 = vperm.xlu0 %1030, %v993
      %v1032 = vpop.permute.xlu0 %1031
      %1035 = vset.pattern.permute.xlu0 0
      %1036 = vperm.xlu0 %1035, %v994
      %v1037 = vpop.permute.xlu0 %1036
      %1040 = vset.pattern.permute.xlu0 0
      %1041 = vperm.xlu0 %1040, %v995
      %v1042 = vpop.permute.xlu0 %1041
      %1045 = vset.pattern.permute.xlu0 0
      %1046 = vperm.xlu0 %1045, %v996
      %v1047 = vpop.permute.xlu0 %1046
      %1050 = vset.pattern.permute.xlu0 0
      %1051 = vperm.xlu0 %1050, %v997
      %v1052 = vpop.permute.xlu0 %1051
      %1055 = vset.pattern.permute.xlu0 0
      %1056 = vperm.xlu0 %1055, %v998
      %v1057 = vpop.permute.xlu0 %1056
      %1060 = vset.pattern.permute.xlu0 0
      %1061 = vperm.xlu0 %1060, %v999
      %v1062 = vpop.permute.xlu0 %1061
      %1065 = vset.pattern.permute.xlu0 0
      %1066 = vperm.xlu0 %1065, %v1000
      %v1067 = vpop.permute.xlu0 %1066
      %1070 = vset.pattern.permute.xlu0 0
      %1071 = vperm.xlu0 %1070, %v1001
      %v1072 = vpop.permute.xlu0 %1071
      %1075 = vset.pattern.permute.xlu0 0
      %1076 = vperm.xlu0 %1075, %v1002
      %v1077 = vpop.permute.xlu0 %1076
      %1080 = vset.pattern.permute.xlu0 0
      %1081 = vperm.xlu0 %1080, %v1003
      %v1082 = vpop.permute.xlu0 %1081
      %v1100 = vunpack.c.l.b16 %v940
      %v1101 = vunpack.c.h.b16 %v940
      %v1102 = vunpack.c.l.b16 %v941
      %v1103 = vunpack.c.h.b16 %v941
      %v1104 = vunpack.c.l.b16 %v942
      %v1105 = vunpack.c.h.b16 %v942
      %v1106 = vunpack.c.l.b16 %v943
      %v1107 = vunpack.c.h.b16 %v943
      %v1108 = vunpack.c.l.b16 %v944
      %v1109 = vunpack.c.h.b16 %v944
      %v1110 = vunpack.c.l.b16 %v945
      %v1111 = vunpack.c.h.b16 %v945
      %v1112 = vunpack.c.l.b16 %v946
      %v1113 = vunpack.c.h.b16 %v946
      %v1114 = vunpack.c.l.b16 %v947
      %v1115 = vunpack.c.h.b16 %v947
      %v1116 = vunpack.c.l.b16 %v948
      %v1117 = vunpack.c.h.b16 %v948
      %v1118 = vunpack.c.l.b16 %v949
      %v1119 = vunpack.c.h.b16 %v949
      %v1120 = vunpack.c.l.b16 %v950
      %v1121 = vunpack.c.h.b16 %v950
      %v1122 = vunpack.c.l.b16 %v951
      %v1123 = vunpack.c.h.b16 %v951
      %v1124 = vunpack.c.l.b16 %v952
      %v1125 = vunpack.c.h.b16 %v952
      %v1126 = vunpack.c.l.b16 %v953
      %v1127 = vunpack.c.h.b16 %v953
      %v1128 = vunpack.c.l.b16 %v954
      %v1129 = vunpack.c.h.b16 %v954
      %v1130 = vunpack.c.l.b16 %v955
      %v1131 = vunpack.c.h.b16 %v955
      %v1132 = vpack.c.b16 %v1102, %v1100
      %v1133 = vpack.c.b16 %v1103, %v1101
      %v1134 = vpack.c.b16 %v1106, %v1104
      %v1135 = vpack.c.b16 %v1107, %v1105
      %v1136 = vpack.c.b16 %v1110, %v1108
      %v1137 = vpack.c.b16 %v1111, %v1109
      %v1138 = vpack.c.b16 %v1114, %v1112
      %v1139 = vpack.c.b16 %v1115, %v1113
      %v1140 = vpack.c.b16 %v1118, %v1116
      %v1141 = vpack.c.b16 %v1119, %v1117
      %v1142 = vpack.c.b16 %v1122, %v1120
      %v1143 = vpack.c.b16 %v1123, %v1121
      %v1144 = vpack.c.b16 %v1126, %v1124
      %v1145 = vpack.c.b16 %v1127, %v1125
      %v1146 = vpack.c.b16 %v1130, %v1128
      %v1147 = vpack.c.b16 %v1131, %v1129
      %1164 = vmatprep.subr.bf16.mxu0 %v971
      %1165 = vmatpush1.bf16.msra.mxu0 %v970
      %1166 = vmatprep.subr.bf16.mxu0 %v969
      %1167 = vmatpush1.bf16.msra.mxu0 %v968
      %1168 = vmatprep.subr.bf16.mxu0 %v967
      %1169 = vmatpush1.bf16.msra.mxu0 %v966
      %1170 = vmatprep.subr.bf16.mxu0 %v965
      %1171 = vmatpush1.bf16.msra.mxu0 %v964
      %1172 = vmatprep.subr.bf16.mxu0 %v963
      %1173 = vmatpush1.bf16.msra.mxu0 %v962
      %1174 = vmatprep.subr.bf16.mxu0 %v961
      %1175 = vmatpush1.bf16.msra.mxu0 %v960
      %1176 = vmatprep.subr.bf16.mxu0 %v959
      %1177 = vmatpush1.bf16.msra.mxu0 %v958
      %1178 = vmatprep.subr.bf16.mxu0 %v957
      %1179 = vmatpush1.bf16.msra.mxu0 %v956
      %1180 = vmatprep.subr.bf16.mxu0 %v987
      %1181 = vmatpush2.bf16.msra.mxu0 %v986
      %1182 = vmatprep.subr.bf16.mxu0 %v985
      %1183 = vmatpush2.bf16.msra.mxu0 %v984
      %1184 = vmatprep.subr.bf16.mxu0 %v983
      %1185 = vmatpush2.bf16.msra.mxu0 %v982
      %1186 = vmatprep.subr.bf16.mxu0 %v981
      %1187 = vmatpush2.bf16.msra.mxu0 %v980
      %1188 = vmatprep.subr.bf16.mxu0 %v979
      %1189 = vmatpush2.bf16.msra.mxu0 %v978
      %1190 = vmatprep.subr.bf16.mxu0 %v977
      %1191 = vmatpush2.bf16.msra.mxu0 %v976
      %1192 = vmatprep.subr.bf16.mxu0 %v975
      %1193 = vmatpush2.bf16.msra.mxu0 %v974
      %1194 = vmatprep.subr.bf16.mxu0 %v973
      %1195 = vmatpush2.bf16.msra.mxu0 %v972
      %1196 = vmatprep.mubr.bf16.mxu0 %v1133
      %1197 = vmatmul.mubr.bf16.gmra.mxu0 %v1132
      %v1198 = vpop.f32.mrf.mxu0
      %v1199 = vadd.f32 %v1007, %v1198
      %v1200 = vpop.f32.mrf.mxu0
      %v1201 = vadd.f32 %v1007, %v1200
      %v1202 = vpop.f32.mrf.mxu0
      %v1203 = vadd.f32 %v1012, %v1202
      %v1204 = vpop.f32.mrf.mxu0
      %v1205 = vadd.f32 %v1012, %v1204
      %1206 = vmatprep.mubr.bf16.mxu0 %v1135
      %1207 = vmatmul.mubr.bf16.gmra.mxu0 %v1134
      %v1208 = vpop.f32.mrf.mxu0
      %v1209 = vadd.f32 %v1017, %v1208
      %v1210 = vpop.f32.mrf.mxu0
      %v1211 = vadd.f32 %v1017, %v1210
      %v1212 = vpop.f32.mrf.mxu0
      %v1213 = vadd.f32 %v1022, %v1212
      %v1214 = vpop.f32.mrf.mxu0
      %v1215 = vadd.f32 %v1022, %v1214
      %1216 = vmatprep.mubr.bf16.mxu0 %v1137
      %1217 = vmatmul.mubr.bf16.gmra.mxu0 %v1136
      %v1218 = vpop.f32.mrf.mxu0
      %v1219 = vadd.f32 %v1027, %v1218
      %v1220 = vpop.f32.mrf.mxu0
      %v1221 = vadd.f32 %v1027, %v1220
      %v1222 = vpop.f32.mrf.mxu0
      %v1223 = vadd.f32 %v1032, %v1222
      %v1224 = vpop.f32.mrf.mxu0
      %v1225 = vadd.f32 %v1032, %v1224
      %1226 = vmatprep.mubr.bf16.mxu0 %v1139
      %1227 = vmatmul.mubr.bf16.gmra.mxu0 %v1138
      %v1228 = vpop.f32.mrf.mxu0
      %v1229 = vadd.f32 %v1037, %v1228
      %v1230 = vpop.f32.mrf.mxu0
      %v1231 = vadd.f32 %v1037, %v1230
      %v1232 = vpop.f32.mrf.mxu0
      %v1233 = vadd.f32 %v1042, %v1232
      %v1234 = vpop.f32.mrf.mxu0
      %v1235 = vadd.f32 %v1042, %v1234
      %1236 = vmatprep.mubr.bf16.mxu0 %v1141
      %1237 = vmatmul.mubr.bf16.gmra.mxu0 %v1140
      %v1238 = vpop.f32.mrf.mxu0
      %v1239 = vadd.f32 %v1047, %v1238
      %v1240 = vpop.f32.mrf.mxu0
      %v1241 = vadd.f32 %v1047, %v1240
      %v1242 = vpop.f32.mrf.mxu0
      %v1243 = vadd.f32 %v1052, %v1242
      %v1244 = vpop.f32.mrf.mxu0
      %v1245 = vadd.f32 %v1052, %v1244
      %1246 = vmatprep.mubr.bf16.mxu0 %v1143
      %1247 = vmatmul.mubr.bf16.gmra.mxu0 %v1142
      %v1248 = vpop.f32.mrf.mxu0
      %v1249 = vadd.f32 %v1057, %v1248
      %v1250 = vpop.f32.mrf.mxu0
      %v1251 = vadd.f32 %v1057, %v1250
      %v1252 = vpop.f32.mrf.mxu0
      %v1253 = vadd.f32 %v1062, %v1252
      %v1254 = vpop.f32.mrf.mxu0
      %v1255 = vadd.f32 %v1062, %v1254
      %1256 = vmatprep.mubr.bf16.mxu0 %v1145
      %1257 = vmatmul.mubr.bf16.gmra.mxu0 %v1144
      %v1258 = vpop.f32.mrf.mxu0
      %v1259 = vadd.f32 %v1067, %v1258
      %v1260 = vpop.f32.mrf.mxu0
      %v1261 = vadd.f32 %v1067, %v1260
      %v1262 = vpop.f32.mrf.mxu0
      %v1263 = vadd.f32 %v1072, %v1262
      %v1264 = vpop.f32.mrf.mxu0
      %v1265 = vadd.f32 %v1072, %v1264
      %1266 = vmatprep.mubr.bf16.mxu0 %v1147
      %1267 = vmatmul.mubr.bf16.gmra.mxu0 %v1146
      %v1268 = vpop.f32.mrf.mxu0
      %v1269 = vadd.f32 %v1077, %v1268
      %v1270 = vpop.f32.mrf.mxu0
      %v1271 = vadd.f32 %v1077, %v1270
      %v1272 = vpop.f32.mrf.mxu0
      %v1273 = vadd.f32 %v1082, %v1272
      %v1274 = vpop.f32.mrf.mxu0
      %v1275 = vadd.f32 %v1082, %v1274
      %1276 = vdwg.mxu0
      %v1277 = vmax.f32 %v1199, 0.0
      %v1278 = vmax.f32 %v1201, 0.0
      %v1279 = vmax.f32 %v1203, 0.0
      %v1280 = vmax.f32 %v1205, 0.0
      %v1281 = vmax.f32 %v1209, 0.0
      %v1282 = vmax.f32 %v1211, 0.0
      %v1283 = vmax.f32 %v1213, 0.0
      %v1284 = vmax.f32 %v1215, 0.0
      %v1285 = vmax.f32 %v1219, 0.0
      %v1286 = vmax.f32 %v1221, 0.0
      %v1287 = vmax.f32 %v1223, 0.0
      %v1288 = vmax.f32 %v1225, 0.0
      %v1289 = vmax.f32 %v1229, 0.0
      %v1290 = vmax.f32 %v1231, 0.0
      %v1291 = vmax.f32 %v1233, 0.0
      %v1292 = vmax.f32 %v1235, 0.0
      %v1293 = vmax.f32 %v1239, 0.0
      %v1294 = vmax.f32 %v1241, 0.0
      %v1295 = vmax.f32 %v1243, 0.0
      %v1296 = vmax.f32 %v1245, 0.0
      %v1297 = vmax.f32 %v1249, 0.0
      %v1298 = vmax.f32 %v1251, 0.0
      %v1299 = vmax.f32 %v1253, 0.0
      %v1300 = vmax.f32 %v1255, 0.0
      %v1301 = vmax.f32 %v1259, 0.0
      %v1302 = vmax.f32 %v1261, 0.0
      %v1303 = vmax.f32 %v1263, 0.0
      %v1304 = vmax.f32 %v1265, 0.0
      %v1305 = vmax.f32 %v1269, 0.0
      %v1306 = vmax.f32 %v1271, 0.0
      %v1307 = vmax.f32 %v1273, 0.0
      %v1308 = vmax.f32 %v1275, 0.0
      %v1309 = vld [vmem:[%s5] sm:$0xf]
      %v1310 = vld [vmem:[%s5 + $0x4] sm:$0xf]
      %v1311 = vld [vmem:[%s5 + $0x8] sm:$0x3]
      %v1312 = vpack.c.bf16 %v1279, %v1277
      %v1313 = vpack.c.bf16 %v1280, %v1278
      %v1314 = vpack.c.bf16 %v1283, %v1281
      %v1315 = vpack.c.bf16 %v1284, %v1282
      %v1316 = vpack.c.bf16 %v1287, %v1285
      %v1317 = vpack.c.bf16 %v1288, %v1286
      %v1318 = vpack.c.bf16 %v1291, %v1289
      %v1319 = vpack.c.bf16 %v1292, %v1290
      %v1320 = vpack.c.bf16 %v1295, %v1293
      %v1321 = vpack.c.bf16 %v1296, %v1294
      %v1322 = vpack.c.bf16 %v1299, %v1297
      %v1323 = vpack.c.bf16 %v1300, %v1298
      %v1324 = vpack.c.bf16 %v1303, %v1301
      %v1325 = vpack.c.bf16 %v1304, %v1302
      %v1326 = vpack.c.bf16 %v1307, %v1305
      %v1327 = vpack.c.bf16 %v1308, %v1306
      %v1328 = vld [vmem:[%s6] sm:$0xff]
      %v1329 = vld [vmem:[%s6 + $0x8] sm:$0xff]
      %v1330 = vld [vmem:[%s6 + $0x10] sm:$0xf]
      %1332 = vset.pattern.permute.xlu0 0
      %1333 = vperm.xlu0 %1332, %v1328
      %v1334 = vpop.permute.xlu0 %1333
      %1337 = vset.pattern.permute.xlu0 0
      %1338 = vperm.xlu0 %1337, %v1329
      %v1339 = vpop.permute.xlu0 %1338
      %1342 = vset.pattern.permute.xlu0 0
      %1343 = vperm.xlu0 %1342, %v1330
      %v1344 = vpop.permute.xlu0 %1343
      %v1349 = vunpack.c.l.b16 %v1309
      %v1350 = vunpack.c.l.b16 %v1310
      %v1351 = vunpack.c.l.b16 %v1311
      %v1352 = vpack.c.b16 %v1350, %v1349
      %v1353 = vpack.c.b16 %v1351, %v1351
      %1356 = vmatprep.subr.bf16.mxu0 %v1327
      %1357 = vmatpush1.bf16.msra.mxu0 %v1326
      %1358 = vmatprep.subr.bf16.mxu0 %v1325
      %1359 = vmatpush1.bf16.msra.mxu0 %v1324
      %1360 = vmatprep.subr.bf16.mxu0 %v1323
      %1361 = vmatpush1.bf16.msra.mxu0 %v1322
      %1362 = vmatprep.subr.bf16.mxu0 %v1321
      %1363 = vmatpush1.bf16.msra.mxu0 %v1320
      %1364 = vmatprep.subr.bf16.mxu0 %v1319
      %1365 = vmatpush1.bf16.msra.mxu0 %v1318
      %1366 = vmatprep.subr.bf16.mxu0 %v1317
      %1367 = vmatpush1.bf16.msra.mxu0 %v1316
      %1368 = vmatprep.subr.bf16.mxu0 %v1315
      %1369 = vmatpush1.bf16.msra.mxu0 %v1314
      %1370 = vmatprep.subr.bf16.mxu0 %v1313
      %1371 = vmatpush1.bf16.msra.mxu0 %v1312
      %1372 = vmatprep.subr.bf16.mxu0 0
      %1373 = vmatpush2.bf16.msra.mxu0 0
      %1374 = vmatprep.subr.bf16.mxu0 0
      %1375 = vmatpush2.bf16.msra.mxu0 0
      %1376 = vmatprep.subr.bf16.mxu0 0
      %1377 = vmatpush2.bf16.msra.mxu0 0
      %1378 = vmatprep.subr.bf16.mxu0 0
      %1379 = vmatpush2.bf16.msra.mxu0 0
      %1380 = vmatprep.subr.bf16.mxu0 0
      %1381 = vmatpush2.bf16.msra.mxu0 0
      %1382 = vmatprep.subr.bf16.mxu0 0
      %1383 = vmatpush2.bf16.msra.mxu0 0
      %1384 = vmatprep.subr.bf16.mxu0 0
      %1385 = vmatpush2.bf16.msra.mxu0 0
      %1386 = vmatprep.subr.bf16.mxu0 0
      %1387 = vmatpush2.bf16.msra.mxu0 0
      %1388 = vmatprep.mubr.bf16.mxu0 0
      %1389 = vmatmul.mubr.bf16.gmra.mxu0 %v1352
      %v1390 = vpop.f32.mrf.mxu0
      %v1391 = vadd.f32 %v1334, %v1390
      %v1392 = vpop.f32.mrf.mxu0
      %v1393 = vadd.f32 %v1334, %v1392
      %v1394 = vpop.f32.mrf.mxu0
      %v1395 = vadd.f32 %v1339, %v1394
      %v1396 = vpop.f32.mrf.mxu0
      %v1397 = vadd.f32 %v1339, %v1396
      %1398 = vmatprep.mubr.bf16.mxu0 0
      %1399 = vmatmul.mubr.bf16.gmra.mxu0 %v1353
      %v1400 = vpop.f32.mrf.mxu0
      %v1401 = vadd.f32 %v1344, %v1400
      %v1402 = vpop.f32.mrf.mxu0
      %v1403 = vadd.f32 %v1344, %v1402
      %v1404 = vpop.f32.mrf.mxu0
      %v1405 = vpop.f32.mrf.mxu0
      %1406 = vdwg.mxu0
      %1407 = vst [vmem:[%s316] sm:$0xff] %v1391
      %1408 = vst [vmem:[%s316 + $0x8] sm:$0xff] %v1393
      %1409 = vst [vmem:[%s316 + $0x10] sm:$0xff] %v1395
      %1410 = vst [vmem:[%s316 + $0x18] sm:$0xff] %v1397
      %1411 = vst [vmem:[%s316 + $0x20] sm:$0xf] %v1401
      %1412 = vst [vmem:[%s316 + $0x28] sm:$0xf] %v1403
      %s1413 = smul.u32 2, %s23
      %p1414 = scmp.lt.s32.totalorder %s22, 1
      %s1415 = scalar_select %p1414, %s22, 1
      %p1416 = scmp.lt.s32.totalorder %s1413, 1
      %s1417 = scalar_select %p1416, %s1413, 1
      %s1418 = smul.addr %s1415, 6
      %s1419 = sadd.s32 %s1417, %s1418
      %s1420 = smul.addr %s1419, 8
      %s1421 = scalar_lea.vmem %s7, %s1420
      // Predicated region
      $region49: #{shallow_big_forward.1} parent=47 // pred_check
        %p1422 = pneg %p204
      $region50: #{shallow_big_forward.1} parent=47 // pred_check_branch
        %1424 = sbr.rel (%p1422) target = $region52
      $region51: #{shallow_big_forward.1} parent=47 // pred_region
        %s1425 = smul.u32 2, %s23
      $region52: #{shallow_big_forward.1} parent=47 // pred_fallthru
        _
    $region48: #{shallow_big_forward.1} parent=5 // pred_fallthru
      _
    %p1426 = scmp.le.s32.totalorder 2, %s13
    // Predicated region
    $region53: #{shallow_big_forward.1} parent=5 // pred_check
      %p1427 = pneg %p1426
    $region54: #{shallow_big_forward.1} parent=5 // pred_check_branch
      %1429 = sbr.rel (%p1427) target = $region56
    $region55: #{shallow_big_forward.1} parent=5 // pred_region
      %s1430 = ssub.s32 %s13, 2
      // Predicated region
      $region57: #{shallow_big_forward.1} parent=55 // pred_check
        %p1431 = pneg %p210
      $region58: #{shallow_big_forward.1} parent=55 // pred_check_branch
        %1433 = sbr.rel (%p1431) target = $region60
      $region59: #{shallow_big_forward.1} parent=55 // pred_region
        %s1434 = smul.u32 2, %s25
        %p1435 = scmp.lt.s32.totalorder %s24, 1
        %s1436 = scalar_select %p1435, %s24, 1
        %p1437 = scmp.lt.s32.totalorder %s1434, 1
        %s1438 = scalar_select %p1437, %s1434, 1
        %s1439 = smul.addr %s1436, 6
        %s1440 = sadd.s32 %s1438, %s1439
        %s1441 = smul.addr %s1440, 8
        %s1442 = scalar_lea.vmem %s7, %s1441
      $region60: #{shallow_big_forward.1} parent=55 // pred_fallthru
        _
    $region56: #{shallow_big_forward.1} parent=5 // pred_fallthru
      _
  $region6: #{shallow_big_forward.1} parent=0 // loop_footer
    %s17 = sadd.s32 1, %s13
  $region7: #{shallow_big_forward.1} parent=0 // loop_footer_branch
    %12 = sbr.rel target = $region3
  $region8: #{shallow_big_forward.1} parent=0 // loop_exit
    _

</llo_original>
